<compile_context>
chip_gen: v5e
topology: v5e:2x2
jax: 0.10.0
libtpu: 0.0.40
codegen_flags: <defaults>
</compile_context>

<pallas_src>
import functools

import jax
import jax.numpy as jnp
from jax.experimental import pallas as pl
from jax.experimental.pallas import tpu as pltpu


def _mlp_kernel(*refs, num_hidden, dot_dtype):
    """Batch-on-lane MLP forward for one batch tile.

    x_ref : (input_dim, tile_n)   w0_ref: (W, input_dim)   b0_ref: (W, 1)
    wh_ref: (num_hidden, W, W)    bh_ref: (num_hidden, W, 1)
    wo_ref: (W, 1) column         bo_ref: (1, 1)            o_ref : (1, tile_n)
    """
    if num_hidden > 0:
        x_ref, w0_ref, b0_ref, wh_ref, bh_ref, wo_ref, bo_ref, o_ref = refs
    else:
        x_ref, w0_ref, b0_ref, wo_ref, bo_ref, o_ref = refs
        wh_ref = bh_ref = None

    def dot(w, a):
        if dot_dtype is not None:
            w = w.astype(dot_dtype)
            a = a.astype(dot_dtype)
        return jnp.dot(w, a, preferred_element_type=jnp.float32)

    # First layer: (W, in) @ (in, tile_n) -> (W, tile_n), bias + ReLU in f32.
    h = dot(w0_ref[...], x_ref[...])
    h = jnp.maximum(h + b0_ref[...], 0.0)

    # Hidden layers (statically unrolled; num_hidden is tiny).
    for l in range(num_hidden):
        h = dot(wh_ref[l], h)
        h = jnp.maximum(h + bh_ref[l], 0.0)

    # Output layer: VPU multiply + cross-sublane (XLU) reduce instead of an
    # M=1 MXU matmul -> frees the vex slot / result FIFO, f32 throughout.
    out = jnp.sum(h * wo_ref[...], axis=0, keepdims=True)   # (1, tile_n)
    o_ref[...] = jax.nn.sigmoid(out + bo_ref[...])


def mlp_forward(x, params, *, tile_n=4096, dot_dtype=None):
    """Run the MLP forward pass with a Pallas TPU kernel.

    x: [N, input_dim] float32 (any N; padded internally).
    params: dict with w0 [W, in], b0 [W, 1], wh [L-1, W, W], bh [L-1, W, 1],
            wo [1, W], bo [1, 1]  (PyTorch nn.Linear [out, in] weight layout).
    dot_dtype: optional operand dtype for the matmuls (e.g. jnp.bfloat16 on
               v6e/v7x); accumulation + elementwise math stay float32.
    Returns [N, 1] float32.
    """
    N, input_dim = x.shape
    w0, b0 = params["w0"], params["b0"]
    wh, bh = params["wh"], params["bh"]
    wo, bo = params["wo"], params["bo"]
    width = w0.shape[0]
    num_hidden = wh.shape[0]

    # Lane-aligned batch tile; never over-pad a tiny batch.
    tile_n = max(128, (tile_n // 128) * 128)
    n_ceil = pl.cdiv(N, 128) * 128                 # minimal lane-aligned batch
    tile_n = min(tile_n, n_ceil)
    # Ensure >=2 grid steps when possible so v7x's two TensorCores both get
    # work under dimension_semantics=("parallel",).  v5e/v6e unaffected.
    if n_ceil >= 256:
        tile_n = min(tile_n, max(128, ((n_ceil // 2) // 128) * 128))
    n_pad = pl.cdiv(N, tile_n) * tile_n
    num_steps = n_pad // tile_n

    # Single fused pad + transpose into the batch-on-lane [input_dim, n_pad]
    # layout (zero tail columns are computed then discarded).
    x_t = jnp.pad(x, ((0, n_pad - N), (0, 0))).T
    if dot_dtype is not None:
        x_t = x_t.astype(dot_dtype)                # halve HBM bytes on x

    wo_col = wo.reshape(width, 1)                  # (1, W) -> (W, 1), no data move

    kernel = functools.partial(_mlp_kernel, num_hidden=num_hidden,
                               dot_dtype=dot_dtype)

    def full(arr):
        nd = arr.ndim
        return pl.BlockSpec(arr.shape, lambda i, _nd=nd: (0,) * _nd)

    # Triple-buffer small x tiles on long grids to hide DMA issue latency
    # behind the few-microsecond per-step compute.
    if tile_n <= 1024 and num_steps >= 3:
        x_spec = pl.BlockSpec((input_dim, tile_n), lambda i: (0, i),
                              pipeline_mode=pl.Buffered(3))
    else:
        x_spec = pl.BlockSpec((input_dim, tile_n), lambda i: (0, i))

    args = [x_t, w0, b0]
    in_specs = [x_spec, full(w0), full(b0)]
    if num_hidden > 0:
        args += [wh, bh]
        in_specs += [full(wh), full(bh)]
    args += [wo_col, bo]
    in_specs += [full(wo_col), full(bo)]

    itemsize = jnp.dtype(dot_dtype or jnp.float32).itemsize
    flops = 2 * n_pad * (input_dim * width + num_hidden * width * width + width)
    bytes_accessed = (itemsize * n_pad * input_dim          # x read
                      + 4 * n_pad                           # out write
                      + 4 * (width * (input_dim + 1)        # w0, b0
                             + num_hidden * width * (width + 1)
                             + width + 1))                  # wo, bo

    out = pl.pallas_call(
        kernel,
        out_shape=jax.ShapeDtypeStruct((1, n_pad), jnp.float32),
        grid_spec=pltpu.PrefetchScalarGridSpec(
            num_scalar_prefetch=0,
            grid=(num_steps,),
            in_specs=in_specs,
            out_specs=pl.BlockSpec((1, tile_n), lambda i: (0, i)),
        ),
        compiler_params=pltpu.CompilerParams(
            dimension_semantics=("parallel",)),
        cost_estimate=pl.CostEstimate(
            flops=flops,
            transcendentals=n_pad,          # sigmoid -> exp per element
            bytes_accessed=bytes_accessed),
    )(*args)

    # (1, n_pad) lane-dense result -> (N, 1).
    return out.reshape(-1)[:N, None]


def init_mlp_params(key, num_mlp_layers, mlp_width, feat_dim, num_lod):
    """Init mirroring the PyTorch module's parameter shapes & init.

    Weights: xavier_uniform (as in the module), kept in [out, in] layout.
    Biases:  PyTorch nn.Linear default uniform(-1/sqrt(fan_in), 1/sqrt(fan_in)),
             stored as [out, 1] columns (batch-on-lane broadcast).
    """
    input_dim = feat_dim * num_lod
    W = mlp_width

    def xavier(key, fan_out, fan_in):
        bound = jnp.sqrt(6.0 / (fan_in + fan_out))
        return jax.random.uniform(key, (fan_out, fan_in), jnp.float32,
                                  -bound, bound)

    def bias(key, fan_in, fan_out):
        bound = 1.0 / jnp.sqrt(float(fan_in))
        return jax.random.uniform(key, (fan_out, 1), jnp.float32,
                                  -bound, bound)

    keys = jax.random.split(key, 2 * (num_mlp_layers + 1))
    k_iter = iter(keys)

    w0 = xavier(next(k_iter), W, input_dim)
    b0 = bias(next(k_iter), input_dim, W)

    wh_list, bh_list = [], []
    for _ in range(num_mlp_layers - 1):
        wh_list.append(xavier(next(k_iter), W, W))
        bh_list.append(bias(next(k_iter), W, W))
    wh = (jnp.stack(wh_list, axis=0) if wh_list
          else jnp.zeros((0, W, W), jnp.float32))
    bh = (jnp.stack(bh_list, axis=0) if bh_list
          else jnp.zeros((0, W, 1), jnp.float32))

    wo = xavier(next(k_iter), 1, W)
    bo = bias(next(k_iter), W, 1)

    return {"w0": w0, "b0": b0, "wh": wh, "bh": bh, "wo": wo, "bo": bo}


def mlp_reference(x, params):
    """Pure-JAX reference of the same forward pass (for verification)."""
    h = jnp.maximum(x @ params["w0"].T + params["b0"][:, 0], 0.0)
    for l in range(params["wh"].shape[0]):
        h = jnp.maximum(h @ params["wh"][l].T + params["bh"][l, :, 0], 0.0)
    return jax.nn.sigmoid(h @ params["wo"].T + params["bo"][:, 0])


if __name__ == "__main__":
    # Shapes consistent with the module: num_mlp_layers=2, width=32,
    # feat_dim=4, num_lod=2 -> input_dim=8.
    num_mlp_layers, mlp_width, feat_dim, num_lod = 2, 32, 4, 2
    N = 1000

    key = jax.random.PRNGKey(0)
    k_params, k_x, k_params1, k_x1, k_x2 = jax.random.split(key, 5)
    params = init_mlp_params(k_params, num_mlp_layers, mlp_width,
                             feat_dim, num_lod)
    x = jax.random.normal(k_x, (N, feat_dim * num_lod), jnp.float32)

    # Default path: batch padding + 2-step grid (both v7x cores get work).
    out = jax.block_until_ready(mlp_forward(x, params))
    ref = mlp_reference(x, params)
    assert out.shape == (N, 1)
    assert jnp.allclose(out, ref, atol=1e-5, rtol=1e-5)

    # num_mlp_layers == 1 path (no hidden-layer stack) — robustness check.
    params1 = init_mlp_params(k_params1, 1, mlp_width, feat_dim, num_lod)
    x1 = jax.random.normal(k_x1, (16, feat_dim * num_lod), jnp.float32)
    out1 = jax.block_until_ready(mlp_forward(x1, params1))
    assert out1.shape == (16, 1)
    assert jnp.allclose(out1, mlp_reference(x1, params1), atol=1e-5, rtol=1e-5)

    # Long-grid path exercising the pl.Buffered(3) x stream (8 steps of 256).
    x2 = jax.random.normal(k_x2, (2048, feat_dim * num_lod), jnp.float32)
    out2 = jax.block_until_ready(mlp_forward(x2, params, tile_n=256))
    assert jnp.allclose(out2, mlp_reference(x2, params), atol=1e-5, rtol=1e-5)

    # bf16 dot-operand path (v6e/v7x MXU + HBM win); looser tolerance.
    out_bf16 = jax.block_until_ready(
        mlp_forward(x, params, dot_dtype=jnp.bfloat16))
    assert jnp.allclose(out_bf16, ref, atol=5e-2, rtol=0)

    print("KERNEL_OK")
</pallas_src>

<mosaic_0001>
module attributes {stable_mosaic.version = 11 : i64} {
  func.func @_mlp_kernel(%arg0: i32, %arg1: memref<8x512xf32, #tpu.memory_space<vmem>>, %arg2: memref<32x8xf32, #tpu.memory_space<vmem>>, %arg3: memref<32x1xf32, #tpu.memory_space<vmem>>, %arg4: memref<1x32x32xf32, #tpu.memory_space<vmem>>, %arg5: memref<1x32x1xf32, #tpu.memory_space<vmem>>, %arg6: memref<32x1xf32, #tpu.memory_space<vmem>>, %arg7: memref<1x1xf32, #tpu.memory_space<vmem>>, %arg8: memref<1x512xf32, #tpu.memory_space<vmem>>) attributes {dimension_semantics = [#tpu.dimension_semantics<parallel>], iteration_bounds = array<i64: 2>, scalar_prefetch = 0 : i64, scratch_operands = 0 : i64, tpu.core_type = #tpu.core_type<tc>, window_params = [{transform_indices = @transform_0, window_bounds = array<i64: 8, 512>}, {pipeline_mode = #tpu.pipeline_mode<synchronous>, transform_indices = @transform_1, window_bounds = array<i64: 32, 8>}, {pipeline_mode = #tpu.pipeline_mode<synchronous>, transform_indices = @transform_2, window_bounds = array<i64: 32, 1>}, {pipeline_mode = #tpu.pipeline_mode<synchronous>, transform_indices = @transform_3, window_bounds = array<i64: 1, 32, 32>}, {pipeline_mode = #tpu.pipeline_mode<synchronous>, transform_indices = @transform_4, window_bounds = array<i64: 1, 32, 1>}, {pipeline_mode = #tpu.pipeline_mode<synchronous>, transform_indices = @transform_5, window_bounds = array<i64: 32, 1>}, {pipeline_mode = #tpu.pipeline_mode<synchronous>, transform_indices = @transform_6, window_bounds = array<i64: 1, 1>}, {transform_indices = @transform_7, window_bounds = array<i64: 1, 512>}]} {
    %c0 = arith.constant 0 : index
    %c0_0 = arith.constant 0 : index
    %0 = vector.load %arg2[%c0, %c0_0] : memref<32x8xf32, #tpu.memory_space<vmem>>, vector<32x8xf32>
    %c0_1 = arith.constant 0 : index
    %c0_2 = arith.constant 0 : index
    %1 = vector.load %arg1[%c0_1, %c0_2] : memref<8x512xf32, #tpu.memory_space<vmem>>, vector<8x512xf32>
    %cst = arith.constant dense<0.000000e+00> : vector<32x512xf32>
    %2 = tpu.matmul %0, %1, %cst {dimension_numbers = #tpu.dot_dimension_numbers<[1], [0], [0], [1], [0, 0, 1, 1], [], []>} : vector<32x8xf32>, vector<8x512xf32>, vector<32x512xf32> -> vector<32x512xf32>
    %c0_3 = arith.constant 0 : index
    %c0_4 = arith.constant 0 : index
    %3 = vector.load %arg3[%c0_3, %c0_4] : memref<32x1xf32, #tpu.memory_space<vmem>>, vector<32x1xf32>
    %4 = vector.broadcast %3 : vector<32x1xf32> to vector<32x512xf32>
    %5 = arith.addf %2, %4 : vector<32x512xf32>
    %cst_5 = arith.constant 0.000000e+00 : f32
    %6 = vector.broadcast %cst_5 : f32 to vector<32x512xf32>
    %7 = arith.maximumf %5, %6 : vector<32x512xf32>
    %c0_6 = arith.constant 0 : index
    %c0_7 = arith.constant 0 : index
    %c0_8 = arith.constant 0 : index
    %8 = vector.load %arg4[%c0_6, %c0_7, %c0_8] : memref<1x32x32xf32, #tpu.memory_space<vmem>>, vector<1x32x32xf32>
    %9 = vector.shape_cast %8 : vector<1x32x32xf32> to vector<32x32xf32>
    %cst_9 = arith.constant dense<0.000000e+00> : vector<32x512xf32>
    %10 = tpu.matmul %9, %7, %cst_9 {dimension_numbers = #tpu.dot_dimension_numbers<[1], [0], [0], [1], [0, 0, 1, 1], [], []>} : vector<32x32xf32>, vector<32x512xf32>, vector<32x512xf32> -> vector<32x512xf32>
    %c0_10 = arith.constant 0 : index
    %c0_11 = arith.constant 0 : index
    %c0_12 = arith.constant 0 : index
    %11 = vector.load %arg5[%c0_10, %c0_11, %c0_12] : memref<1x32x1xf32, #tpu.memory_space<vmem>>, vector<1x32x1xf32>
    %12 = vector.shape_cast %11 : vector<1x32x1xf32> to vector<32x1xf32>
    %13 = vector.broadcast %12 : vector<32x1xf32> to vector<32x512xf32>
    %14 = arith.addf %10, %13 : vector<32x512xf32>
    %cst_13 = arith.constant 0.000000e+00 : f32
    %15 = vector.broadcast %cst_13 : f32 to vector<32x512xf32>
    %16 = arith.maximumf %14, %15 : vector<32x512xf32>
    %c0_14 = arith.constant 0 : index
    %c0_15 = arith.constant 0 : index
    %17 = vector.load %arg6[%c0_14, %c0_15] : memref<32x1xf32, #tpu.memory_space<vmem>>, vector<32x1xf32>
    %18 = vector.broadcast %17 : vector<32x1xf32> to vector<32x512xf32>
    %19 = arith.mulf %16, %18 : vector<32x512xf32>
    %cst_16 = arith.constant dense<0.000000e+00> : vector<512xf32>
    %20 = vector.multi_reduction <add>, %19, %cst_16 [0] : vector<32x512xf32> to vector<512xf32>
    %21 = vector.shape_cast %20 : vector<512xf32> to vector<1x512xf32>
    %c0_17 = arith.constant 0 : index
    %c0_18 = arith.constant 0 : index
    %22 = vector.load %arg7[%c0_17, %c0_18] : memref<1x1xf32, #tpu.memory_space<vmem>>, vector<1x1xf32>
    %23 = vector.broadcast %22 : vector<1x1xf32> to vector<1x512xf32>
    %24 = arith.addf %21, %23 : vector<1x512xf32>
    %25 = arith.negf %24 : vector<1x512xf32>
    %26 = math.exp %25 : vector<1x512xf32>
    %cst_19 = arith.constant 1.000000e+00 : f32
    %27 = vector.broadcast %cst_19 : f32 to vector<1x512xf32>
    %28 = arith.addf %27, %26 : vector<1x512xf32>
    %29 = arith.divf %27, %28 : vector<1x512xf32>
    %c0_20 = arith.constant 0 : index
    %c0_21 = arith.constant 0 : index
    %30 = vector.load %arg8[%c0_20, %c0_21] : memref<1x512xf32, #tpu.memory_space<vmem>>, vector<1x512xf32>
    tpu.vector_store %arg8[%c0_20, %c0_21], %29 {strides = array<i32>} : memref<1x512xf32, #tpu.memory_space<vmem>>, vector<1x512xf32>,
    return
  }
  func.func @transform_0(%arg0: i32) -> (i32, i32) {
    %c0_i32 = arith.constant 0 : i32
    %c0_i32_0 = arith.constant 0 : i32
    return %c0_i32, %arg0 : i32, i32
  }
  func.func @transform_1(%arg0: i32) -> (i32, i32) {
    %c0_i32 = arith.constant 0 : i32
    %c0_i32_0 = arith.constant 0 : i32
    %c0_i32_1 = arith.constant 0 : i32
    return %c0_i32, %c0_i32_0 : i32, i32
  }
  func.func @transform_2(%arg0: i32) -> (i32, i32) {
    %c0_i32 = arith.constant 0 : i32
    %c0_i32_0 = arith.constant 0 : i32
    %c0_i32_1 = arith.constant 0 : i32
    return %c0_i32, %c0_i32_0 : i32, i32
  }
  func.func @transform_3(%arg0: i32) -> (i32, i32, i32) {
    %c0_i32 = arith.constant 0 : i32
    %c0_i32_0 = arith.constant 0 : i32
    %c0_i32_1 = arith.constant 0 : i32
    %c0_i32_2 = arith.constant 0 : i32
    return %c0_i32, %c0_i32_0, %c0_i32_1 : i32, i32, i32
  }
  func.func @transform_4(%arg0: i32) -> (i32, i32, i32) {
    %c0_i32 = arith.constant 0 : i32
    %c0_i32_0 = arith.constant 0 : i32
    %c0_i32_1 = arith.constant 0 : i32
    %c0_i32_2 = arith.constant 0 : i32
    return %c0_i32, %c0_i32_0, %c0_i32_1 : i32, i32, i32
  }
  func.func @transform_5(%arg0: i32) -> (i32, i32) {
    %c0_i32 = arith.constant 0 : i32
    %c0_i32_0 = arith.constant 0 : i32
    %c0_i32_1 = arith.constant 0 : i32
    return %c0_i32, %c0_i32_0 : i32, i32
  }
  func.func @transform_6(%arg0: i32) -> (i32, i32) {
    %c0_i32 = arith.constant 0 : i32
    %c0_i32_0 = arith.constant 0 : i32
    %c0_i32_1 = arith.constant 0 : i32
    return %c0_i32, %c0_i32_0 : i32, i32
  }
  func.func @transform_7(%arg0: i32) -> (i32, i32) {
    %c0_i32 = arith.constant 0 : i32
    %c0_i32_0 = arith.constant 0 : i32
    return %c0_i32, %arg0 : i32, i32
  }
}

</mosaic_0001>

<llo_original>
// kernel: tpu_custom_call.1
$region0: #{tpu_custom_call.1}
  #allocation0 [shape = 'u32[]', space=smem, size = 0x4, offset = 0x4, fixed_abs, tag = 'smem constant byte address 0x4 - core index']
  #allocation1 [shape = 'u32[72,128]{1,0:T(1,128)}', space=vmem, size = 0x9000, scoped, tag = 'internal scratch']
  #allocation2 [shape = 'f32[1,1]{1,0:T(1,128)S(1)}', space=vmem, size = 0x200, scoped, tag = 'scoped memory for tpu_custom_call.1']
  %s0 = inlined_call_operand.vmem [shape: f32[8,1024], index: 0, kind: input, shape index: {}]
  %s1 = inlined_call_operand.vmem [shape: f32[32,8], index: 1, kind: input, shape index: {}]
  %s2 = inlined_call_operand.vmem [shape: f32[32,1], index: 2, kind: input, shape index: {}]
  %s3 = inlined_call_operand.vmem [shape: f32[1,32,32], index: 3, kind: input, shape index: {}]
  %s4 = inlined_call_operand.vmem [shape: f32[1,32,1], index: 4, kind: input, shape index: {}]
  %s5 = inlined_call_operand.vmem [shape: f32[32,1], index: 5, kind: input, shape index: {}]
  %s6 = inlined_call_operand.<no memory space> [shape: f32[1,1], index: 6, kind: input, shape index: {}]
  %s7 = inlined_call_operand.hbm [shape: f32[1,1024], index: 7, kind: output, shape index: {}]
  %s8 = sld [smem:[#allocation0]]
  $region61: #{tpu_custom_call.1} parent=0
    _
  %s10 = ssub.s32 1, %s8
  %s11 = scalar_select 0, %s10, %s8
  %v12 = vstv %s6
  %13 = vst [vmem:[#allocation2] sm:$0x1] %v12
  $region1: #{tpu_custom_call.1} parent=0
    #allocation3 [shape = 'u8[4096]{0}', space=vmem, size = 0x1000, scoped, tag = 'output window, operand 0']
    #allocation4 [shape = 's32[2]{0}', space=sflag, size = 0x8, scoped, tag = 'scoped memory for tpu_custom_call.1']
    %14 = vsyncpa [#allocation4], 0
    %s15 = scalar_lea.sflag [#allocation4], 1
    %16 = vsyncpa %s15, 0
    loop: start=0, step=1, limit=4
    $region2: #{tpu_custom_call.1} parent=1 // loop_pre_header
      _
    $region3: #{tpu_custom_call.1} parent=1 // loop_header
      %s18 = sphi 0, %s22
      %p19 = scmp.ge.s32.totalorder %s18, 4
      %s28 = sphi 0, %s30
      %s31 = sphi 0, %s28
      %s32 = sphi 0, %s31
      %s48 = sphi 0, %s32
      %s52 = sphi 0, %s52
      %s54 = sphi 0, %s52
      %s55 = sphi 0, %s54
      %s69 = sphi 0, %s55
      %s73 = sphi 0, %s73
      %s75 = sphi 0, %s73
      %s76 = sphi 0, %s75
      %s90 = sphi 0, %s76
      %s94 = sphi 0, %s94
      %s96 = sphi 0, %s94
      %s97 = sphi 0, %s96
      %s111 = sphi 0, %s97
      %s115 = sphi 0, %s115
      %s117 = sphi 0, %s115
      %s118 = sphi 0, %s117
      %s132 = sphi 0, %s118
      %s136 = sphi 0, %s136
      %s138 = sphi 0, %s136
      %s139 = sphi 0, %s138
      %s153 = sphi 0, %s139
      %s157 = sphi 0, %s157
      %s159 = sphi 0, %s157
      %s160 = sphi 0, %s159
      %s174 = sphi 0, %s160
      %s180 = sphi 0, %s182
      %s183 = sphi 0, %s180
      %s184 = sphi 0, %s183
      %s200 = sphi 0, %s184
    $region4: #{tpu_custom_call.1} parent=1 // loop_header_branch
      %21 = sbr.rel (%p19) target = $region8
    $region5: #{tpu_custom_call.1} parent=1 // loop_body
      %s23 = ssub.s32 %s18, 1
      %s24 = ssub.s32 %s18, 2
      %s25 = sadd.s32 %s18, 1
      %s26 = ssub.s32 %s18, %s25
      %p27 = scmp.eq.s32.totalorder %s26, 0
      %s29 = sadd.s32 %s28, 1
      %s30 = scalar_select %p27, %s28, %s29
      %p33 = pneg %p27
      %p34 = scmp.eq.s32.totalorder %s18, 1
      %p35 = por %p33, %p34
      %p36 = scmp.ne.s32.totalorder %s28, %s31
      %p37 = scmp.eq.s32.totalorder %s18, 0
      %p38 = por %p36, %p37
      %p39 = scmp.ne.s32.totalorder %s28, %s31
      %p40 = scmp.eq.s32.totalorder %s23, 1
      %p41 = por %p39, %p40
      %p42 = scmp.ne.s32.totalorder %s31, %s32
      %p43 = scmp.eq.s32.totalorder %s23, 0
      %p44 = por %p42, %p43
      %p45 = scmp.ne.s32.totalorder %s31, %s32
      %p46 = scmp.eq.s32.totalorder %s24, 1
      %p47 = por %p45, %p46
      %p49 = scmp.ne.s32.totalorder %s32, %s48
      %p50 = scmp.eq.s32.totalorder %s24, 0
      %p51 = por %p49, %p50
      %s53 = sadd.s32 %s52, 1
      %p56 = scmp.eq.s32.totalorder %s18, 1
      %p57 = scmp.ne.s32.totalorder %s52, %s54
      %p58 = scmp.eq.s32.totalorder %s18, 0
      %p59 = por %p57, %p58
      %p60 = scmp.ne.s32.totalorder %s52, %s54
      %p61 = scmp.eq.s32.totalorder %s23, 1
      %p62 = por %p60, %p61
      %p63 = scmp.ne.s32.totalorder %s54, %s55
      %p64 = scmp.eq.s32.totalorder %s23, 0
      %p65 = por %p63, %p64
      %p66 = scmp.ne.s32.totalorder %s54, %s55
      %p67 = scmp.eq.s32.totalorder %s24, 1
      %p68 = por %p66, %p67
      %p70 = scmp.ne.s32.totalorder %s55, %s69
      %p71 = scmp.eq.s32.totalorder %s24, 0
      %p72 = por %p70, %p71
      %s74 = sadd.s32 %s73, 1
      %p77 = scmp.eq.s32.totalorder %s18, 1
      %p78 = scmp.ne.s32.totalorder %s73, %s75
      %p79 = scmp.eq.s32.totalorder %s18, 0
      %p80 = por %p78, %p79
      %p81 = scmp.ne.s32.totalorder %s73, %s75
      %p82 = scmp.eq.s32.totalorder %s23, 1
      %p83 = por %p81, %p82
      %p84 = scmp.ne.s32.totalorder %s75, %s76
      %p85 = scmp.eq.s32.totalorder %s23, 0
      %p86 = por %p84, %p85
      %p87 = scmp.ne.s32.totalorder %s75, %s76
      %p88 = scmp.eq.s32.totalorder %s24, 1
      %p89 = por %p87, %p88
      %p91 = scmp.ne.s32.totalorder %s76, %s90
      %p92 = scmp.eq.s32.totalorder %s24, 0
      %p93 = por %p91, %p92
      %s95 = sadd.s32 %s94, 1
      %p98 = scmp.eq.s32.totalorder %s18, 1
      %p99 = scmp.ne.s32.totalorder %s94, %s96
      %p100 = scmp.eq.s32.totalorder %s18, 0
      %p101 = por %p99, %p100
      %p102 = scmp.ne.s32.totalorder %s94, %s96
      %p103 = scmp.eq.s32.totalorder %s23, 1
      %p104 = por %p102, %p103
      %p105 = scmp.ne.s32.totalorder %s96, %s97
      %p106 = scmp.eq.s32.totalorder %s23, 0
      %p107 = por %p105, %p106
      %p108 = scmp.ne.s32.totalorder %s96, %s97
      %p109 = scmp.eq.s32.totalorder %s24, 1
      %p110 = por %p108, %p109
      %p112 = scmp.ne.s32.totalorder %s97, %s111
      %p113 = scmp.eq.s32.totalorder %s24, 0
      %p114 = por %p112, %p113
      %s116 = sadd.s32 %s115, 1
      %p119 = scmp.eq.s32.totalorder %s18, 1
      %p120 = scmp.ne.s32.totalorder %s115, %s117
      %p121 = scmp.eq.s32.totalorder %s18, 0
      %p122 = por %p120, %p121
      %p123 = scmp.ne.s32.totalorder %s115, %s117
      %p124 = scmp.eq.s32.totalorder %s23, 1
      %p125 = por %p123, %p124
      %p126 = scmp.ne.s32.totalorder %s117, %s118
      %p127 = scmp.eq.s32.totalorder %s23, 0
      %p128 = por %p126, %p127
      %p129 = scmp.ne.s32.totalorder %s117, %s118
      %p130 = scmp.eq.s32.totalorder %s24, 1
      %p131 = por %p129, %p130
      %p133 = scmp.ne.s32.totalorder %s118, %s132
      %p134 = scmp.eq.s32.totalorder %s24, 0
      %p135 = por %p133, %p134
      %s137 = sadd.s32 %s136, 1
      %p140 = scmp.eq.s32.totalorder %s18, 1
      %p141 = scmp.ne.s32.totalorder %s136, %s138
      %p142 = scmp.eq.s32.totalorder %s18, 0
      %p143 = por %p141, %p142
      %p144 = scmp.ne.s32.totalorder %s136, %s138
      %p145 = scmp.eq.s32.totalorder %s23, 1
      %p146 = por %p144, %p145
      %p147 = scmp.ne.s32.totalorder %s138, %s139
      %p148 = scmp.eq.s32.totalorder %s23, 0
      %p149 = por %p147, %p148
      %p150 = scmp.ne.s32.totalorder %s138, %s139
      %p151 = scmp.eq.s32.totalorder %s24, 1
      %p152 = por %p150, %p151
      %p154 = scmp.ne.s32.totalorder %s139, %s153
      %p155 = scmp.eq.s32.totalorder %s24, 0
      %p156 = por %p154, %p155
      %s158 = sadd.s32 %s157, 1
      %p161 = scmp.eq.s32.totalorder %s18, 1
      %p162 = scmp.ne.s32.totalorder %s157, %s159
      %p163 = scmp.eq.s32.totalorder %s18, 0
      %p164 = por %p162, %p163
      %p165 = scmp.ne.s32.totalorder %s157, %s159
      %p166 = scmp.eq.s32.totalorder %s23, 1
      %p167 = por %p165, %p166
      %p168 = scmp.ne.s32.totalorder %s159, %s160
      %p169 = scmp.eq.s32.totalorder %s23, 0
      %p170 = por %p168, %p169
      %p171 = scmp.ne.s32.totalorder %s159, %s160
      %p172 = scmp.eq.s32.totalorder %s24, 1
      %p173 = por %p171, %p172
      %p175 = scmp.ne.s32.totalorder %s160, %s174
      %p176 = scmp.eq.s32.totalorder %s24, 0
      %p177 = por %p175, %p176
      %s178 = ssub.s32 %s18, %s25
      %p179 = scmp.eq.s32.totalorder %s178, 0
      %s181 = sadd.s32 %s180, 1
      %s182 = scalar_select %p179, %s180, %s181
      %p185 = pneg %p179
      %p186 = scmp.eq.s32.totalorder %s18, 1
      %p187 = por %p185, %p186
      %p188 = scmp.ne.s32.totalorder %s180, %s183
      %p189 = scmp.eq.s32.totalorder %s18, 0
      %p190 = por %p188, %p189
      %p191 = scmp.ne.s32.totalorder %s180, %s183
      %p192 = scmp.eq.s32.totalorder %s23, 1
      %p193 = por %p191, %p192
      %p194 = scmp.ne.s32.totalorder %s183, %s184
      %p195 = scmp.eq.s32.totalorder %s23, 0
      %p196 = por %p194, %p195
      %p197 = scmp.ne.s32.totalorder %s183, %s184
      %p198 = scmp.eq.s32.totalorder %s24, 1
      %p199 = por %p197, %p198
      %p201 = scmp.ne.s32.totalorder %s184, %s200
      %p202 = scmp.eq.s32.totalorder %s24, 0
      %p203 = por %p201, %p202
      %p204 = scmp.le.s32.totalorder 1, %s18
      %p205 = scmp.lt.s32.totalorder %s18, 3
      %p206 = pnand %p204, %p205
      %p207 = pneg %p206
      // Predicated region
      $region9: #{tpu_custom_call.1} parent=5 // pred_check
        _
      $region10: #{tpu_custom_call.1} parent=5 // pred_check_branch
        %209 = sbr.rel (%p206) target = $region12
      $region11: #{tpu_custom_call.1} parent=5 // pred_region
        %s210 = ssub.s32 %s18, 1
        // Predicated region
        $region13: #{tpu_custom_call.1} parent=11 // pred_check
          %p211 = pneg %p65
        $region14: #{tpu_custom_call.1} parent=11 // pred_check_branch
          %213 = sbr.rel (%p211) target = $region16
        $region15: #{tpu_custom_call.1} parent=11 // pred_region
          _
        $region16: #{tpu_custom_call.1} parent=11 // pred_fallthru
          _
        // Predicated region
        $region17: #{tpu_custom_call.1} parent=11 // pred_check
          %p214 = pneg %p86
        $region18: #{tpu_custom_call.1} parent=11 // pred_check_branch
          %216 = sbr.rel (%p214) target = $region20
        $region19: #{tpu_custom_call.1} parent=11 // pred_region
          _
        $region20: #{tpu_custom_call.1} parent=11 // pred_fallthru
          _
        // Predicated region
        $region21: #{tpu_custom_call.1} parent=11 // pred_check
          %p217 = pneg %p107
        $region22: #{tpu_custom_call.1} parent=11 // pred_check_branch
          %219 = sbr.rel (%p217) target = $region24
        $region23: #{tpu_custom_call.1} parent=11 // pred_region
          _
        $region24: #{tpu_custom_call.1} parent=11 // pred_fallthru
          _
        // Predicated region
        $region25: #{tpu_custom_call.1} parent=11 // pred_check
          %p220 = pneg %p128
        $region26: #{tpu_custom_call.1} parent=11 // pred_check_branch
          %222 = sbr.rel (%p220) target = $region28
        $region27: #{tpu_custom_call.1} parent=11 // pred_region
          _
        $region28: #{tpu_custom_call.1} parent=11 // pred_fallthru
          _
        // Predicated region
        $region29: #{tpu_custom_call.1} parent=11 // pred_check
          %p223 = pneg %p149
        $region30: #{tpu_custom_call.1} parent=11 // pred_check_branch
          %225 = sbr.rel (%p223) target = $region32
        $region31: #{tpu_custom_call.1} parent=11 // pred_region
          _
        $region32: #{tpu_custom_call.1} parent=11 // pred_fallthru
          _
        // Predicated region
        $region33: #{tpu_custom_call.1} parent=11 // pred_check
          %p226 = pneg %p170
        $region34: #{tpu_custom_call.1} parent=11 // pred_check_branch
          %228 = sbr.rel (%p226) target = $region36
        $region35: #{tpu_custom_call.1} parent=11 // pred_region
          _
        $region36: #{tpu_custom_call.1} parent=11 // pred_fallthru
          _
      $region12: #{tpu_custom_call.1} parent=5 // pred_fallthru
        _
      %p229 = scmp.lt.s32.totalorder %s18, 2
      // Predicated region
      $region37: #{tpu_custom_call.1} parent=5 // pred_check
        %p230 = pneg %p229
      $region38: #{tpu_custom_call.1} parent=5 // pred_check_branch
        %232 = sbr.rel (%p230) target = $region40
      $region39: #{tpu_custom_call.1} parent=5 // pred_region
        // Predicated region
        $region41: #{tpu_custom_call.1} parent=39 // pred_check
          %p233 = pneg %p38
        $region42: #{tpu_custom_call.1} parent=39 // pred_check_branch
          %235 = sbr.rel (%p233) target = $region44
        $region43: #{tpu_custom_call.1} parent=39 // pred_region
          %s236 = smul.u32 4, %s18
          %p237 = scmp.lt.s32.totalorder %s236, 7
          %s238 = scalar_select %p237, %s236, 7
          %s239 = smul.addr %s238, 8
          %s240 = scalar_lea.vmem %s0, %s239
          %s241 = smul.u32 4, %s18
        $region44: #{tpu_custom_call.1} parent=39 // pred_fallthru
          _
      $region40: #{tpu_custom_call.1} parent=5 // pred_fallthru
        _
      %p242 = scmp.le.s32.totalorder 1, %s18
      %p243 = scmp.lt.s32.totalorder %s18, 3
      %p244 = pnand %p242, %p243
      %p245 = pneg %p244
      // Predicated region
      $region45: #{tpu_custom_call.1} parent=5 // pred_check
        _
      $region46: #{tpu_custom_call.1} parent=5 // pred_check_branch
        %247 = sbr.rel (%p244) target = $region48
      $region47: #{tpu_custom_call.1} parent=5 // pred_region
        %s248 = ssub.s32 %s18, 1
        %s249 = smul.u32 4, %s23
        %p250 = scmp.lt.s32.totalorder %s249, 7
        %s251 = scalar_select %p250, %s249, 7
        %s252 = smul.addr %s251, 8
        %s253 = scalar_lea.vmem %s0, %s252
        %p254 = pneg %p44
        %p255 = pneg %p41
        %p256 = pneg %p65
        %p257 = pneg %p62
        %p258 = pneg %p86
        %p259 = pneg %p83
        %p260 = pneg %p107
        %p261 = pneg %p104
        %p262 = pneg %p128
        %p263 = pneg %p125
        %p264 = pneg %p149
        %p265 = pneg %p146
        %p266 = pneg %p170
        %p267 = pneg %p167
        %p268 = pneg %p196
        %p269 = pneg %p193
        %s270 = sand.u32 %s183, 1
        %s271 = scalar_lea.sflag [#allocation4], %s270
        %s272 = sand.u32 %s183, 1
        %s273 = smul.addr %s272, 4
        %s274 = scalar_lea.vmem [#allocation3], %s273
        %s275 = smul.u32 4, %s23
        %p276 = scmp.lt.s32.totalorder %s275, 7
        %s277 = scalar_select %p276, %s275, 7
        %s278 = smul.addr %s277, 8
        %s279 = scalar_lea.vmem %s0, %s278
        %s280 = smul.u32 4, %s23
        %s281 = smul.u32 4, %s23
        %v282 = vld [vmem:[%s1] sm:$0xff]
        %v283 = vld [vmem:[%s1 + $0x8] sm:$0xff]
        %v284 = vld [vmem:[%s1 + $0x10] sm:$0xff]
        %v285 = vld [vmem:[%s1 + $0x18] sm:$0xff]
        %v286 = vld [vmem:[%s279] sm:$0xff]
        %v287 = vld [vmem:[%s279 + $0x8] sm:$0xff]
        %v288 = vld [vmem:[%s279 + $0x10] sm:$0xff]
        %v289 = vld [vmem:[%s279 + $0x18] sm:$0xff]
        %v290 = vld [vmem:[%s2] sm:$0xff]
        %v291 = vld [vmem:[%s2 + $0x8] sm:$0xff]
        %v292 = vld [vmem:[%s2 + $0x10] sm:$0xff]
        %v293 = vld [vmem:[%s2 + $0x18] sm:$0xff]
        %295 = vset.pattern.permute.xlu0 0
        %296 = vperm.xlu0 %295, %v290
        %v297 = vpop.permute.xlu0 %296
        %300 = vset.pattern.permute.xlu0 0
        %301 = vperm.xlu0 %300, %v291
        %v302 = vpop.permute.xlu0 %301
        %305 = vset.pattern.permute.xlu0 0
        %306 = vperm.xlu0 %305, %v292
        %v307 = vpop.permute.xlu0 %306
        %310 = vset.pattern.permute.xlu0 0
        %311 = vperm.xlu0 %310, %v293
        %v312 = vpop.permute.xlu0 %311
        %vm314 = vcmask 64512
        %v316 = vsel %vm314, %v282, 0
        %v319 = vsel %vm314, %v283, 0
        %v322 = vsel %vm314, %v284, 0
        %v325 = vsel %vm314, %v285, 0
        %327 = vmatpush.msra.mxu0 0.0
        %328 = vmatpush.msra.mxu0 0.0
        %329 = vmatpush.msra.mxu0 0.0
        %330 = vmatpush.msra.mxu0 0.0
        %331 = vmatpush.msra.mxu0 0.0
        %332 = vmatpush.msra.mxu0 0.0
        %333 = vmatpush.msra.mxu0 0.0
        %334 = vmatpush.msra.mxu0 0.0
        %335 = vmatpush.msra.mxu0 0.0
        %336 = vmatpush.msra.mxu0 0.0
        %337 = vmatpush.msra.mxu0 0.0
        %338 = vmatpush.msra.mxu0 0.0
        %339 = vmatpush.msra.mxu0 0.0
        %340 = vmatpush.msra.mxu0 0.0
        %341 = vmatpush.msra.mxu0 0.0
        %342 = vmatpush.msra.mxu0 %v286
        %343 = vmatmul.f32.gmra.mxu0 %v316
        %v344 = vpop.f32.mrf.mxu0
        %v345 = vadd.f32 %v297, %v344
        %346 = vmatmul.f32.gmra.mxu0 %v319
        %v347 = vpop.f32.mrf.mxu0
        %v348 = vadd.f32 %v302, %v347
        %349 = vmatmul.f32.gmra.mxu0 %v322
        %v350 = vpop.f32.mrf.mxu0
        %v351 = vadd.f32 %v307, %v350
        %352 = vmatmul.f32.gmra.mxu0 %v325
        %v353 = vpop.f32.mrf.mxu0
        %v354 = vadd.f32 %v312, %v353
        %355 = vdwg.mxu0
        %356 = vmatpush.msra.mxu0 0.0
        %357 = vmatpush.msra.mxu0 0.0
        %358 = vmatpush.msra.mxu0 0.0
        %359 = vmatpush.msra.mxu0 0.0
        %360 = vmatpush.msra.mxu0 0.0
        %361 = vmatpush.msra.mxu0 0.0
        %362 = vmatpush.msra.mxu0 0.0
        %363 = vmatpush.msra.mxu0 0.0
        %364 = vmatpush.msra.mxu0 0.0
        %365 = vmatpush.msra.mxu0 0.0
        %366 = vmatpush.msra.mxu0 0.0
        %367 = vmatpush.msra.mxu0 0.0
        %368 = vmatpush.msra.mxu0 0.0
        %369 = vmatpush.msra.mxu0 0.0
        %370 = vmatpush.msra.mxu0 0.0
        %371 = vmatpush.msra.mxu0 %v287
        %372 = vmatmul.f32.gmra.mxu0 %v316
        %v373 = vpop.f32.mrf.mxu0
        %v374 = vadd.f32 %v297, %v373
        %375 = vmatmul.f32.gmra.mxu0 %v319
        %v376 = vpop.f32.mrf.mxu0
        %v377 = vadd.f32 %v302, %v376
        %378 = vmatmul.f32.gmra.mxu0 %v322
        %v379 = vpop.f32.mrf.mxu0
        %v380 = vadd.f32 %v307, %v379
        %381 = vmatmul.f32.gmra.mxu0 %v325
        %v382 = vpop.f32.mrf.mxu0
        %v383 = vadd.f32 %v312, %v382
        %384 = vdwg.mxu0
        %385 = vmatpush.msra.mxu0 0.0
        %386 = vmatpush.msra.mxu0 0.0
        %387 = vmatpush.msra.mxu0 0.0
        %388 = vmatpush.msra.mxu0 0.0
        %389 = vmatpush.msra.mxu0 0.0
        %390 = vmatpush.msra.mxu0 0.0
        %391 = vmatpush.msra.mxu0 0.0
        %392 = vmatpush.msra.mxu0 0.0
        %393 = vmatpush.msra.mxu0 0.0
        %394 = vmatpush.msra.mxu0 0.0
        %395 = vmatpush.msra.mxu0 0.0
        %396 = vmatpush.msra.mxu0 0.0
        %397 = vmatpush.msra.mxu0 0.0
        %398 = vmatpush.msra.mxu0 0.0
        %399 = vmatpush.msra.mxu0 0.0
        %400 = vmatpush.msra.mxu0 %v288
        %401 = vmatmul.f32.gmra.mxu0 %v316
        %v402 = vpop.f32.mrf.mxu0
        %v403 = vadd.f32 %v297, %v402
        %404 = vmatmul.f32.gmra.mxu0 %v319
        %v405 = vpop.f32.mrf.mxu0
        %v406 = vadd.f32 %v302, %v405
        %407 = vmatmul.f32.gmra.mxu0 %v322
        %v408 = vpop.f32.mrf.mxu0
        %v409 = vadd.f32 %v307, %v408
        %410 = vmatmul.f32.gmra.mxu0 %v325
        %v411 = vpop.f32.mrf.mxu0
        %v412 = vadd.f32 %v312, %v411
        %413 = vdwg.mxu0
        %414 = vmatpush.msra.mxu0 0.0
        %415 = vmatpush.msra.mxu0 0.0
        %416 = vmatpush.msra.mxu0 0.0
        %417 = vmatpush.msra.mxu0 0.0
        %418 = vmatpush.msra.mxu0 0.0
        %419 = vmatpush.msra.mxu0 0.0
        %420 = vmatpush.msra.mxu0 0.0
        %421 = vmatpush.msra.mxu0 0.0
        %422 = vmatpush.msra.mxu0 0.0
        %423 = vmatpush.msra.mxu0 0.0
        %424 = vmatpush.msra.mxu0 0.0
        %425 = vmatpush.msra.mxu0 0.0
        %426 = vmatpush.msra.mxu0 0.0
        %427 = vmatpush.msra.mxu0 0.0
        %428 = vmatpush.msra.mxu0 0.0
        %429 = vmatpush.msra.mxu0 %v289
        %430 = vmatmul.f32.gmra.mxu0 %v316
        %v431 = vpop.f32.mrf.mxu0
        %v432 = vadd.f32 %v297, %v431
        %433 = vmatmul.f32.gmra.mxu0 %v319
        %v434 = vpop.f32.mrf.mxu0
        %v435 = vadd.f32 %v302, %v434
        %436 = vmatmul.f32.gmra.mxu0 %v322
        %v437 = vpop.f32.mrf.mxu0
        %v438 = vadd.f32 %v307, %v437
        %439 = vmatmul.f32.gmra.mxu0 %v325
        %v440 = vpop.f32.mrf.mxu0
        %v441 = vadd.f32 %v312, %v440
        %442 = vdwg.mxu0
        %v443 = vmax.f32 %v345, 0.0
        %v444 = vmax.f32 %v374, 0.0
        %v445 = vmax.f32 %v403, 0.0
        %v446 = vmax.f32 %v432, 0.0
        %v447 = vmax.f32 %v348, 0.0
        %v448 = vmax.f32 %v377, 0.0
        %v449 = vmax.f32 %v406, 0.0
        %v450 = vmax.f32 %v435, 0.0
        %v451 = vmax.f32 %v351, 0.0
        %v452 = vmax.f32 %v380, 0.0
        %v453 = vmax.f32 %v409, 0.0
        %v454 = vmax.f32 %v438, 0.0
        %v455 = vmax.f32 %v354, 0.0
        %v456 = vmax.f32 %v383, 0.0
        %v457 = vmax.f32 %v412, 0.0
        %v458 = vmax.f32 %v441, 0.0
        %v459 = vld [vmem:[%s3] sm:$0xff]
        %v460 = vld [vmem:[%s3 + $0x8] sm:$0xff]
        %v461 = vld [vmem:[%s3 + $0x10] sm:$0xff]
        %v462 = vld [vmem:[%s3 + $0x18] sm:$0xff]
        %v463 = vld [vmem:[%s4] sm:$0xff]
        %v464 = vld [vmem:[%s4 + $0x8] sm:$0xff]
        %v465 = vld [vmem:[%s4 + $0x10] sm:$0xff]
        %v466 = vld [vmem:[%s4 + $0x18] sm:$0xff]
        %468 = vset.pattern.permute.xlu0 0
        %469 = vperm.xlu0 %468, %v463
        %v470 = vpop.permute.xlu0 %469
        %473 = vset.pattern.permute.xlu0 0
        %474 = vperm.xlu0 %473, %v464
        %v475 = vpop.permute.xlu0 %474
        %478 = vset.pattern.permute.xlu0 0
        %479 = vperm.xlu0 %478, %v465
        %v480 = vpop.permute.xlu0 %479
        %483 = vset.pattern.permute.xlu0 0
        %484 = vperm.xlu0 %483, %v466
        %v485 = vpop.permute.xlu0 %484
        %vm487 = vcmask 261120
        %v489 = vsel %vm487, %v459, 0
        %v492 = vsel %vm487, %v460, 0
        %v495 = vsel %vm487, %v461, 0
        %v498 = vsel %vm487, %v462, 0
        %500 = vmatpush.msra.mxu0 0.0
        %501 = vmatpush.msra.mxu0 0.0
        %502 = vmatpush.msra.mxu0 0.0
        %503 = vmatpush.msra.mxu0 0.0
        %504 = vmatpush.msra.mxu0 0.0
        %505 = vmatpush.msra.mxu0 0.0
        %506 = vmatpush.msra.mxu0 0.0
        %507 = vmatpush.msra.mxu0 0.0
        %508 = vmatpush.msra.mxu0 0.0
        %509 = vmatpush.msra.mxu0 0.0
        %510 = vmatpush.msra.mxu0 0.0
        %511 = vmatpush.msra.mxu0 0.0
        %512 = vmatpush.msra.mxu0 %v455
        %513 = vmatpush.msra.mxu0 %v451
        %514 = vmatpush.msra.mxu0 %v447
        %515 = vmatpush.msra.mxu0 %v443
        %516 = vmatmul.f32.gmra.mxu0 %v489
        %v517 = vpop.f32.mrf.mxu0
        %v518 = vadd.f32 %v470, %v517
        %519 = vmatmul.f32.gmra.mxu0 %v492
        %v520 = vpop.f32.mrf.mxu0
        %v521 = vadd.f32 %v475, %v520
        %522 = vmatmul.f32.gmra.mxu0 %v495
        %v523 = vpop.f32.mrf.mxu0
        %v524 = vadd.f32 %v480, %v523
        %525 = vmatmul.f32.gmra.mxu0 %v498
        %v526 = vpop.f32.mrf.mxu0
        %v527 = vadd.f32 %v485, %v526
        %528 = vdwg.mxu0
        %529 = vmatpush.msra.mxu0 0.0
        %530 = vmatpush.msra.mxu0 0.0
        %531 = vmatpush.msra.mxu0 0.0
        %532 = vmatpush.msra.mxu0 0.0
        %533 = vmatpush.msra.mxu0 0.0
        %534 = vmatpush.msra.mxu0 0.0
        %535 = vmatpush.msra.mxu0 0.0
        %536 = vmatpush.msra.mxu0 0.0
        %537 = vmatpush.msra.mxu0 0.0
        %538 = vmatpush.msra.mxu0 0.0
        %539 = vmatpush.msra.mxu0 0.0
        %540 = vmatpush.msra.mxu0 0.0
        %541 = vmatpush.msra.mxu0 %v456
        %542 = vmatpush.msra.mxu0 %v452
        %543 = vmatpush.msra.mxu0 %v448
        %544 = vmatpush.msra.mxu0 %v444
        %545 = vmatmul.f32.gmra.mxu0 %v489
        %v546 = vpop.f32.mrf.mxu0
        %v547 = vadd.f32 %v470, %v546
        %548 = vmatmul.f32.gmra.mxu0 %v492
        %v549 = vpop.f32.mrf.mxu0
        %v550 = vadd.f32 %v475, %v549
        %551 = vmatmul.f32.gmra.mxu0 %v495
        %v552 = vpop.f32.mrf.mxu0
        %v553 = vadd.f32 %v480, %v552
        %554 = vmatmul.f32.gmra.mxu0 %v498
        %v555 = vpop.f32.mrf.mxu0
        %v556 = vadd.f32 %v485, %v555
        %557 = vdwg.mxu0
        %558 = vmatpush.msra.mxu0 0.0
        %559 = vmatpush.msra.mxu0 0.0
        %560 = vmatpush.msra.mxu0 0.0
        %561 = vmatpush.msra.mxu0 0.0
        %562 = vmatpush.msra.mxu0 0.0
        %563 = vmatpush.msra.mxu0 0.0
        %564 = vmatpush.msra.mxu0 0.0
        %565 = vmatpush.msra.mxu0 0.0
        %566 = vmatpush.msra.mxu0 0.0
        %567 = vmatpush.msra.mxu0 0.0
        %568 = vmatpush.msra.mxu0 0.0
        %569 = vmatpush.msra.mxu0 0.0
        %570 = vmatpush.msra.mxu0 %v457
        %571 = vmatpush.msra.mxu0 %v453
        %572 = vmatpush.msra.mxu0 %v449
        %573 = vmatpush.msra.mxu0 %v445
        %574 = vmatmul.f32.gmra.mxu0 %v489
        %v575 = vpop.f32.mrf.mxu0
        %v576 = vadd.f32 %v470, %v575
        %577 = vmatmul.f32.gmra.mxu0 %v492
        %v578 = vpop.f32.mrf.mxu0
        %v579 = vadd.f32 %v475, %v578
        %580 = vmatmul.f32.gmra.mxu0 %v495
        %v581 = vpop.f32.mrf.mxu0
        %v582 = vadd.f32 %v480, %v581
        %583 = vmatmul.f32.gmra.mxu0 %v498
        %v584 = vpop.f32.mrf.mxu0
        %v585 = vadd.f32 %v485, %v584
        %586 = vdwg.mxu0
        %587 = vmatpush.msra.mxu0 0.0
        %588 = vmatpush.msra.mxu0 0.0
        %589 = vmatpush.msra.mxu0 0.0
        %590 = vmatpush.msra.mxu0 0.0
        %591 = vmatpush.msra.mxu0 0.0
        %592 = vmatpush.msra.mxu0 0.0
        %593 = vmatpush.msra.mxu0 0.0
        %594 = vmatpush.msra.mxu0 0.0
        %595 = vmatpush.msra.mxu0 0.0
        %596 = vmatpush.msra.mxu0 0.0
        %597 = vmatpush.msra.mxu0 0.0
        %598 = vmatpush.msra.mxu0 0.0
        %599 = vmatpush.msra.mxu0 %v458
        %600 = vmatpush.msra.mxu0 %v454
        %601 = vmatpush.msra.mxu0 %v450
        %602 = vmatpush.msra.mxu0 %v446
        %603 = vmatmul.f32.gmra.mxu0 %v489
        %v604 = vpop.f32.mrf.mxu0
        %v605 = vadd.f32 %v470, %v604
        %606 = vmatmul.f32.gmra.mxu0 %v492
        %v607 = vpop.f32.mrf.mxu0
        %v608 = vadd.f32 %v475, %v607
        %609 = vmatmul.f32.gmra.mxu0 %v495
        %v610 = vpop.f32.mrf.mxu0
        %v611 = vadd.f32 %v480, %v610
        %612 = vmatmul.f32.gmra.mxu0 %v498
        %v613 = vpop.f32.mrf.mxu0
        %v614 = vadd.f32 %v485, %v613
        %615 = vdwg.mxu0
        %v616 = vmax.f32 %v518, 0.0
        %v617 = vmax.f32 %v547, 0.0
        %v618 = vmax.f32 %v576, 0.0
        %v619 = vmax.f32 %v605, 0.0
        %v620 = vmax.f32 %v521, 0.0
        %v621 = vmax.f32 %v550, 0.0
        %v622 = vmax.f32 %v579, 0.0
        %v623 = vmax.f32 %v608, 0.0
        %v624 = vmax.f32 %v524, 0.0
        %v625 = vmax.f32 %v553, 0.0
        %v626 = vmax.f32 %v582, 0.0
        %v627 = vmax.f32 %v611, 0.0
        %v628 = vmax.f32 %v527, 0.0
        %v629 = vmax.f32 %v556, 0.0
        %v630 = vmax.f32 %v585, 0.0
        %v631 = vmax.f32 %v614, 0.0
        %v632 = vld [vmem:[%s5] sm:$0xff]
        %v633 = vld [vmem:[%s5 + $0x8] sm:$0xff]
        %v634 = vld [vmem:[%s5 + $0x10] sm:$0xff]
        %v635 = vld [vmem:[%s5 + $0x18] sm:$0xff]
        %637 = vset.pattern.permute.xlu0 0
        %638 = vperm.xlu0 %637, %v632
        %v639 = vpop.permute.xlu0 %638
        %642 = vset.pattern.permute.xlu0 0
        %643 = vperm.xlu0 %642, %v633
        %v644 = vpop.permute.xlu0 %643
        %647 = vset.pattern.permute.xlu0 0
        %648 = vperm.xlu0 %647, %v634
        %v649 = vpop.permute.xlu0 %648
        %652 = vset.pattern.permute.xlu0 0
        %653 = vperm.xlu0 %652, %v635
        %v654 = vpop.permute.xlu0 %653
        %v656 = vmul.f32 %v616, %v639
        %v657 = vmul.f32 %v617, %v639
        %v658 = vmul.f32 %v618, %v639
        %v659 = vmul.f32 %v619, %v639
        %v660 = vmul.f32 %v620, %v644
        %v661 = vmul.f32 %v621, %v644
        %v662 = vmul.f32 %v622, %v644
        %v663 = vmul.f32 %v623, %v644
        %v664 = vmul.f32 %v624, %v649
        %v665 = vmul.f32 %v625, %v649
        %v666 = vmul.f32 %v626, %v649
        %v667 = vmul.f32 %v627, %v649
        %v668 = vmul.f32 %v628, %v654
        %v669 = vmul.f32 %v629, %v654
        %v670 = vmul.f32 %v630, %v654
        %v671 = vmul.f32 %v631, %v654
        %v672 = vadd.f32 %v656, %v660
        %v673 = vadd.f32 %v672, %v664
        %v674 = vadd.f32 %v673, %v668
        %v675 = vrot.slane %v674, 4
        %v676 = vadd.f32 %v674, %v675
        %v677 = vrot.slane %v676, 2
        %v678 = vadd.f32 %v676, %v677
        %v679 = vrot.slane %v678, 1
        %v680 = vadd.f32 %v678, %v679
        %v681 = vadd.f32 %v657, %v661
        %v682 = vadd.f32 %v681, %v665
        %v683 = vadd.f32 %v682, %v669
        %v684 = vrot.slane %v683, 4
        %v685 = vadd.f32 %v683, %v684
        %v686 = vrot.slane %v685, 2
        %v687 = vadd.f32 %v685, %v686
        %v688 = vrot.slane %v687, 1
        %v689 = vadd.f32 %v687, %v688
        %v690 = vadd.f32 %v658, %v662
        %v691 = vadd.f32 %v690, %v666
        %v692 = vadd.f32 %v691, %v670
        %v693 = vrot.slane %v692, 4
        %v694 = vadd.f32 %v692, %v693
        %v695 = vrot.slane %v694, 2
        %v696 = vadd.f32 %v694, %v695
        %v697 = vrot.slane %v696, 1
        %v698 = vadd.f32 %v696, %v697
        %v699 = vadd.f32 %v659, %v663
        %v700 = vadd.f32 %v699, %v667
        %v701 = vadd.f32 %v700, %v671
        %v702 = vrot.slane %v701, 4
        %v703 = vadd.f32 %v701, %v702
        %v704 = vrot.slane %v703, 2
        %v705 = vadd.f32 %v703, %v704
        %v706 = vrot.slane %v705, 1
        %v707 = vadd.f32 %v705, %v706
        %v708 = vld [vmem:[#allocation2] sm:$0x1]
        %710 = vset.pattern.permute.xlu0 0
        %711 = vperm.xlu0 %710, %v708
        %v712 = vpop.permute.xlu0 %711
        %v714 = vperm.slane %v712, 0
        %v715 = vadd.f32 %v680, %v714
        %v716 = vadd.f32 %v689, %v714
        %v717 = vadd.f32 %v698, %v714
        %v718 = vadd.f32 %v707, %v714
        %v719 = vxor.u32 %v715, 2147483648
        %v720 = vxor.u32 %v716, 2147483648
        %v721 = vxor.u32 %v717, 2147483648
        %v722 = vxor.u32 %v718, 2147483648
        %v723 = vmul.f32 %v719, 1.442695
        %v724 = vpow.pop %v723
        %v725 = vmul.f32 %v720, 1.442695
        %v726 = vpow.pop %v725
        %v727 = vmul.f32 %v721, 1.442695
        %v728 = vpow.pop %v727
        %v729 = vmul.f32 %v722, 1.442695
        %v730 = vpow.pop %v729
        %v731 = vadd.f32 %v724, 1.0
        %v732 = vadd.f32 %v726, 1.0
        %v733 = vadd.f32 %v728, 1.0
        %v734 = vadd.f32 %v730, 1.0
        %v735 = vrcp.pop %v731
        %v736 = vmul.f32 %v731, %v735
        %v737 = vsub.f32 1.0, %v736
        %v738 = vmul.f32 %v735, %v737
        %v739 = vadd.f32 %v735, %v738
        %vm740 = vweird.f32 %v731
        %vm741 = vweird.f32 %v735
        %vm742 = vmor %vm740, %vm741
        %v743 = vsel %vm742, %v735, %v739
        %v744 = vand.u32 2147483647, %v731
        %vm745 = vcmp.eq.f32.partialorder %v744, 8.507059e+37
        %v746 = vand.u32 %v731, 2147483648
        %v747 = vor.u32 1.1754944e-38, %v746
        %v748 = vsel %vm745, %v747, %v743
        %v749 = vmul.f32 1.0, %v748
        %v750 = vrcp.pop %v732
        %v751 = vmul.f32 %v732, %v750
        %v752 = vsub.f32 1.0, %v751
        %v753 = vmul.f32 %v750, %v752
        %v754 = vadd.f32 %v750, %v753
        %vm755 = vweird.f32 %v732
        %vm756 = vweird.f32 %v750
        %vm757 = vmor %vm755, %vm756
        %v758 = vsel %vm757, %v750, %v754
        %v759 = vand.u32 2147483647, %v732
        %vm760 = vcmp.eq.f32.partialorder %v759, 8.507059e+37
        %v761 = vand.u32 %v732, 2147483648
        %v762 = vor.u32 1.1754944e-38, %v761
        %v763 = vsel %vm760, %v762, %v758
        %v764 = vmul.f32 1.0, %v763
        %v765 = vrcp.pop %v733
        %v766 = vmul.f32 %v733, %v765
        %v767 = vsub.f32 1.0, %v766
        %v768 = vmul.f32 %v765, %v767
        %v769 = vadd.f32 %v765, %v768
        %vm770 = vweird.f32 %v733
        %vm771 = vweird.f32 %v765
        %vm772 = vmor %vm770, %vm771
        %v773 = vsel %vm772, %v765, %v769
        %v774 = vand.u32 2147483647, %v733
        %vm775 = vcmp.eq.f32.partialorder %v774, 8.507059e+37
        %v776 = vand.u32 %v733, 2147483648
        %v777 = vor.u32 1.1754944e-38, %v776
        %v778 = vsel %vm775, %v777, %v773
        %v779 = vmul.f32 1.0, %v778
        %v780 = vrcp.pop %v734
        %v781 = vmul.f32 %v734, %v780
        %v782 = vsub.f32 1.0, %v781
        %v783 = vmul.f32 %v780, %v782
        %v784 = vadd.f32 %v780, %v783
        %vm785 = vweird.f32 %v734
        %vm786 = vweird.f32 %v780
        %vm787 = vmor %vm785, %vm786
        %v788 = vsel %vm787, %v780, %v784
        %v789 = vand.u32 2147483647, %v734
        %vm790 = vcmp.eq.f32.partialorder %v789, 8.507059e+37
        %v791 = vand.u32 %v734, 2147483648
        %v792 = vor.u32 1.1754944e-38, %v791
        %v793 = vsel %vm790, %v792, %v788
        %v794 = vmul.f32 1.0, %v793
        %v799 = vrot.slane %v764, 7
        %v800 = vrot.slane %v779, 6
        %v801 = vrot.slane %v794, 5
        %vm802 = vcmask 1040384
        %v803 = vsel %vm802, %v749, %v799
        %vm804 = vcmask 1042434
        %v805 = vsel %vm804, %v800, %v801
        %vm806 = vcmask 1041408
        %v807 = vsel %vm806, %v803, %v805
        %v809 = vlaneseq
        %vm810 = vcmp.ge.s32.totalorder %v809, 0
        %vm811 = vcmp.lt.s32.totalorder %v809, 512
        %vm812 = vmand %vm810, %vm811
        %813 = vst.msk [vmem:[%s274] sm:$0xf] %vm812, %v807
        %s814 = sand.u32 %s183, 1
        %s815 = scalar_lea.sflag [#allocation4], %s814
        %s816 = sand.u32 %s183, 1
        %s817 = smul.addr %s816, 4
        %s818 = scalar_lea.vmem [#allocation3], %s817
        // Predicated region
        $region49: #{tpu_custom_call.1} parent=47 // pred_check
          %p819 = pneg %p193
        $region50: #{tpu_custom_call.1} parent=47 // pred_check_branch
          %821 = sbr.rel (%p819) target = $region52
        $region51: #{tpu_custom_call.1} parent=47 // pred_region
          %s822 = smul.u32 4, %s23
          %824 = vsyncadd %s815, 0
          %s825 = scalar_lea.hbm %s7, %s822
          %s827 = sshll.u32 %s818, 4
          %s828 = int_to_ptr.vmem [resolvable:$true] %s827
          %s829 = sshll.u32 %s825, 4
          %s830 = int_to_ptr.hbm [resolvable:$true] %s829
          %832 = dma.vmem_to_hbm [thread:$0]  %s828, 64, %s830, %s815
        $region52: #{tpu_custom_call.1} parent=47 // pred_fallthru
          _
      $region48: #{tpu_custom_call.1} parent=5 // pred_fallthru
        _
      %p833 = scmp.le.s32.totalorder 2, %s18
      // Predicated region
      $region53: #{tpu_custom_call.1} parent=5 // pred_check
        %p834 = pneg %p833
      $region54: #{tpu_custom_call.1} parent=5 // pred_check_branch
        %836 = sbr.rel (%p834) target = $region56
      $region55: #{tpu_custom_call.1} parent=5 // pred_region
        %s837 = ssub.s32 %s18, 2
        // Predicated region
        $region57: #{tpu_custom_call.1} parent=55 // pred_check
          %p838 = pneg %p199
        $region58: #{tpu_custom_call.1} parent=55 // pred_check_branch
          %840 = sbr.rel (%p838) target = $region60
        $region59: #{tpu_custom_call.1} parent=55 // pred_region
          %s841 = sand.u32 %s184, 1
          %s842 = scalar_lea.sflag [#allocation4], %s841
          %s843 = sand.u32 %s184, 1
          %s844 = smul.addr %s843, 4
          %s845 = scalar_lea.vmem [#allocation3], %s844
          %847 = dma.done %s842, 64
        $region60: #{tpu_custom_call.1} parent=55 // pred_fallthru
          _
      $region56: #{tpu_custom_call.1} parent=5 // pred_fallthru
        _
    $region6: #{tpu_custom_call.1} parent=1 // loop_footer
      %s22 = sadd.s32 1, %s18
    $region7: #{tpu_custom_call.1} parent=1 // loop_footer_branch
      %17 = sbr.rel target = $region3
    $region8: #{tpu_custom_call.1} parent=1 // loop_exit
      _
    %848 = vsyncpa [#allocation4], 1
    %s849 = scalar_lea.sflag [#allocation4], 1
    %850 = vsyncpa %s849, 1

</llo_original>
